<compile_context>
chip_gen: v6e
topology: v6e:2x2x1
jax: 0.10.0
libtpu: 0.0.40
codegen_flags: <defaults>
</compile_context>

<pallas_src>
import functools

import jax
import jax.numpy as jnp
from jax.experimental import pallas as pl
from jax.experimental.pallas import tpu as pltpu

OUT_UNITS = 2  # fixed by Trans_decoder (out_units=2 passed to the GMM head)


def _round_up(n, m):
    return ((n + m - 1) // m) * m


def _ceil_div(a, b):
    return -(-a // b)


def _choose_tiling(n_rows, max_tile_rows=8192, min_split_rows=2048, align=16):
    """Pick (tile_rows, grid) so that:
       * tile_rows <= max_tile_rows (VMEM / scoped-default safety),
       * grid >= 2 whenever there is enough work (v7x has 2 TensorCores),
       * tile is balanced to the grid -> padding waste < `align` rows/step."""
    n_al = _round_up(max(n_rows, 1), align)
    grid = max(1, _ceil_div(n_al, max_tile_rows))
    if grid == 1 and n_al >= min_split_rows:
        grid = 2                      # keep both v7x TensorCores busy
    tile = _round_up(_ceil_div(n_al, grid), align)
    grid = _ceil_div(n_al, tile)
    return tile, grid


def _decoder_kernel(x_ref,
                    w1_ref, b1_ref, w2_ref, b2_ref,
                    whead_ref, bhead_ref,
                    strokes_ref, mu_ref, sigma_ref, pi_ref,
                    *, num_components):
    f32 = jnp.float32
    bf16 = jnp.bfloat16
    K = num_components
    CS = K * OUT_UNITS

    # f32 HBM read; in-kernel bf16 cast is a free VPU op (feeds the bf16 MXU).
    x = x_ref[...].astype(bf16)

    # ---- MLP trunk (Linear + ReLU, two layers) — bf16 MXU, f32 accumulate ----
    h = jnp.dot(x, w1_ref[...], preferred_element_type=f32) + b1_ref[...]
    h = jnp.maximum(h, 0.0)
    h = jnp.dot(h.astype(bf16), w2_ref[...], preferred_element_type=f32) + b2_ref[...]
    h = jnp.maximum(h, 0.0)

    # ---- fused GMM heads in ONE f32 matmul -> [mu | log_sigma | pi_logits] ----
    # (FLOPs here are tiny; f32 keeps sigma = exp(.) from amplifying bf16 error)
    heads = jnp.dot(h, whead_ref[...], preferred_element_type=f32) + bhead_ref[...]
    mu = heads[:, 0:CS]
    sigma = jnp.exp(heads[:, CS:2 * CS])
    logits = heads[:, 2 * CS:2 * CS + K]

    # exact softmax over the (small) component axis: pi rows sum to 1.
    m = jnp.max(logits, axis=-1, keepdims=True)
    e = jnp.exp(logits - m)
    pi = e / jnp.sum(e, axis=-1, keepdims=True)

    # ---- greedy draw_sample: pick mu of the highest-pi component ----
    col = jax.lax.broadcasted_iota(jnp.int32, pi.shape, 1)
    max_pi = jnp.max(pi, axis=-1, keepdims=True)
    # first index attaining the max (matches torch.argmax tie-breaking)
    first_idx = jnp.min(jnp.where(pi >= max_pi, col, K), axis=-1, keepdims=True)
    onehot = (col == first_idx).astype(f32)  # (tile_rows, K)

    strokes = jnp.zeros((x.shape[0], OUT_UNITS), f32)
    for k in range(K):  # K is small & static -> unrolled static lane slices
        strokes = strokes + onehot[:, k:k + 1] * mu[:, k * OUT_UNITS:(k + 1) * OUT_UNITS]

    strokes_ref[...] = strokes.astype(strokes_ref.dtype)
    mu_ref[...] = mu.astype(mu_ref.dtype)
    sigma_ref[...] = sigma.astype(sigma_ref.dtype)
    pi_ref[...] = pi.astype(pi_ref.dtype)


def init_params(key, size_embedding, num_components, layer_features):
    """Deterministic nn.Linear-style init: U(-1/sqrt(fan_in), 1/sqrt(fan_in))."""
    assert len(layer_features) == 2, "this script instantiates 2 dense layers"
    dims = [(size_embedding + 1, layer_features[0]),
            (layer_features[0], layer_features[1]),
            (layer_features[1], num_components * OUT_UNITS),   # mu
            (layer_features[1], num_components * OUT_UNITS),   # sigma
            (layer_features[1], num_components)]                # pi
    names = ["1", "2", "mu", "sig", "pi"]
    params = {}
    for name, (fi, fo) in zip(names, dims):
        key, kw, kb = jax.random.split(key, 3)
        bound = 1.0 / (fi ** 0.5)
        params["w" + name] = jax.random.uniform(kw, (fi, fo), jnp.float32, -bound, bound)
        params["b" + name] = jax.random.uniform(kb, (1, fo), jnp.float32, -bound, bound)
    return params


def pack_params(params):
    """One-time packing: bf16 trunk weights + fused [mu|sigma|pi] head (f32)."""
    bf16 = jnp.bfloat16
    return {
        "w1": params["w1"].astype(bf16), "b1": params["b1"],
        "w2": params["w2"].astype(bf16), "b2": params["b2"],
        "whead": jnp.concatenate([params["wmu"], params["wsig"], params["wpi"]], axis=1),
        "bhead": jnp.concatenate([params["bmu"], params["bsig"], params["bpi"]], axis=1),
    }


def trans_decoder_forward(x, packed, num_components,
                          max_tile_rows=8192, min_split_rows=2048,
                          dense_dtype=jnp.bfloat16):
    """x: (B, S, size_embedding+1) f32.  Returns (strokes, mu, sigma, pi)."""
    B, S, D = x.shape
    N = B * S
    K = num_components
    CS = K * OUT_UNITS

    tile, grid = _choose_tiling(N, max_tile_rows, min_split_rows)
    n_pad = tile * grid

    xf = x.reshape(N, D)
    if n_pad != N:
        xf = jnp.pad(xf, ((0, n_pad - N), (0, 0)))   # tiny (< 16*grid rows)

    w1, b1 = packed["w1"], packed["b1"]
    w2, b2 = packed["w2"], packed["b2"]
    whead, bhead = packed["whead"], packed["bhead"]

    def full_spec(arr):
        nd = arr.ndim
        return pl.BlockSpec(arr.shape, lambda i: (0,) * nd)

    kernel = functools.partial(_decoder_kernel, num_components=K)
    strokes, mu, sigma, pi = pl.pallas_call(
        kernel,
        grid=(grid,),
        in_specs=[pl.BlockSpec((tile, D), lambda i: (i, 0)),
                  full_spec(w1), full_spec(b1),
                  full_spec(w2), full_spec(b2),
                  full_spec(whead), full_spec(bhead)],
        out_specs=(pl.BlockSpec((tile, OUT_UNITS), lambda i: (i, 0)),
                   pl.BlockSpec((tile, CS), lambda i: (i, 0)),
                   pl.BlockSpec((tile, CS), lambda i: (i, 0)),
                   pl.BlockSpec((tile, K), lambda i: (i, 0))),
        out_shape=(jax.ShapeDtypeStruct((n_pad, OUT_UNITS), dense_dtype),
                   jax.ShapeDtypeStruct((n_pad, CS), dense_dtype),
                   jax.ShapeDtypeStruct((n_pad, CS), dense_dtype),
                   jax.ShapeDtypeStruct((n_pad, K), jnp.float32)),
        compiler_params=pltpu.CompilerParams(
            dimension_semantics=("parallel",)),
    )(xf, w1, b1, w2, b2, whead, bhead)

    if n_pad != N:
        strokes, mu, sigma, pi = (a[:N] for a in (strokes, mu, sigma, pi))
    return (strokes.reshape(B, S, OUT_UNITS),
            mu.reshape(B, S, CS),
            sigma.reshape(B, S, CS),
            pi.reshape(B, S, K))


def _reference(x, p, num_components):
    """Pure-JAX f32 reference for correctness checking."""
    B, S, D = x.shape
    h = x.reshape(B * S, D)
    h = jnp.maximum(h @ p["w1"] + p["b1"], 0.0)
    h = jnp.maximum(h @ p["w2"] + p["b2"], 0.0)
    mu = h @ p["wmu"] + p["bmu"]
    sigma = jnp.exp(h @ p["wsig"] + p["bsig"])
    pi = jax.nn.softmax(h @ p["wpi"] + p["bpi"], axis=-1)
    comp = jnp.argmax(pi, axis=-1)
    mu3 = mu.reshape(-1, num_components, OUT_UNITS)
    strokes = jnp.take_along_axis(mu3, comp[:, None, None], axis=1)[:, 0, :]
    cs = num_components * OUT_UNITS
    return (strokes.reshape(B, S, OUT_UNITS), mu.reshape(B, S, cs),
            sigma.reshape(B, S, cs), pi.reshape(B, S, num_components))


if __name__ == "__main__":
    # Small, module-consistent sizes.
    size_embedding = 31           # -> input feature dim = size_embedding + 1 = 32
    num_components = 4
    layer_features = [32, 32]
    batch, seq = 2, 8

    key = jax.random.PRNGKey(0)
    key, kx = jax.random.split(key)
    x = jax.random.normal(kx, (batch, seq, size_embedding + 1), jnp.float32)
    params = init_params(key, size_embedding, num_components, layer_features)
    packed = pack_params(params)   # one-time weight prep (hoisted out of forward)

    outs = trans_decoder_forward(x, packed, num_components)
    outs = jax.block_until_ready(outs)
    strokes, mu, sigma, pi = outs

    # Value check vs. f32 reference (bf16 trunk matmuls / bf16 outputs -> loose tol).
    ref_strokes, ref_mu, ref_sigma, ref_pi = _reference(x, params, num_components)
    assert mu.shape == ref_mu.shape and sigma.shape == ref_sigma.shape
    assert pi.shape == ref_pi.shape and strokes.shape == ref_strokes.shape
    f32 = jnp.float32
    assert jnp.allclose(mu.astype(f32), ref_mu, atol=5e-2, rtol=5e-2), "mu mismatch"
    assert jnp.allclose(sigma.astype(f32), ref_sigma, atol=5e-2, rtol=5e-2), "sigma mismatch"
    assert jnp.allclose(pi, ref_pi, atol=5e-2, rtol=5e-2), "pi mismatch"

    # Logic check for the in-kernel greedy sample: strokes must equal the mu of
    # the argmax-pi component computed from the kernel's OWN mu/pi outputs
    # (exact: both strokes and mu are casts of the same in-kernel f32 values).
    comp = jnp.argmax(pi.reshape(-1, num_components), axis=-1)
    mu3 = mu.astype(f32).reshape(-1, num_components, OUT_UNITS)
    sel = jnp.take_along_axis(mu3, comp[:, None, None], axis=1)[:, 0, :]
    assert jnp.allclose(strokes.astype(f32).reshape(-1, OUT_UNITS), sel, atol=1e-6), \
        "greedy sample mismatch"

    print("KERNEL_OK")
</pallas_src>

<mosaic_0001>
module attributes {stable_mosaic.version = 11 : i64} {
  func.func @_decoder_kernel(%arg0: i32, %arg1: memref<16x32xf32, #tpu.memory_space<vmem>>, %arg2: memref<32x32xbf16, #tpu.memory_space<vmem>>, %arg3: memref<1x32xf32, #tpu.memory_space<vmem>>, %arg4: memref<32x32xbf16, #tpu.memory_space<vmem>>, %arg5: memref<1x32xf32, #tpu.memory_space<vmem>>, %arg6: memref<32x20xf32, #tpu.memory_space<vmem>>, %arg7: memref<1x20xf32, #tpu.memory_space<vmem>>, %arg8: memref<16x2xbf16, #tpu.memory_space<vmem>>, %arg9: memref<16x8xbf16, #tpu.memory_space<vmem>>, %arg10: memref<16x8xbf16, #tpu.memory_space<vmem>>, %arg11: memref<16x4xf32, #tpu.memory_space<vmem>>) attributes {dimension_semantics = [#tpu.dimension_semantics<parallel>], iteration_bounds = array<i64: 1>, scalar_prefetch = 0 : i64, scratch_operands = 0 : i64, tpu.core_type = #tpu.core_type<tc>, window_params = [{transform_indices = @transform_0, window_bounds = array<i64: 16, 32>}, {pipeline_mode = #tpu.pipeline_mode<synchronous>, transform_indices = @transform_1, window_bounds = array<i64: 32, 32>}, {pipeline_mode = #tpu.pipeline_mode<synchronous>, transform_indices = @transform_2, window_bounds = array<i64: 1, 32>}, {pipeline_mode = #tpu.pipeline_mode<synchronous>, transform_indices = @transform_3, window_bounds = array<i64: 32, 32>}, {pipeline_mode = #tpu.pipeline_mode<synchronous>, transform_indices = @transform_4, window_bounds = array<i64: 1, 32>}, {pipeline_mode = #tpu.pipeline_mode<synchronous>, transform_indices = @transform_5, window_bounds = array<i64: 32, 20>}, {pipeline_mode = #tpu.pipeline_mode<synchronous>, transform_indices = @transform_6, window_bounds = array<i64: 1, 20>}, {transform_indices = @transform_7, window_bounds = array<i64: 16, 2>}, {transform_indices = @transform_8, window_bounds = array<i64: 16, 8>}, {transform_indices = @transform_9, window_bounds = array<i64: 16, 8>}, {transform_indices = @transform_10, window_bounds = array<i64: 16, 4>}]} {
    %c0 = arith.constant 0 : index
    %c0_0 = arith.constant 0 : index
    %0 = vector.load %arg1[%c0, %c0_0] : memref<16x32xf32, #tpu.memory_space<vmem>>, vector<16x32xf32>
    %1 = arith.truncf %0 : vector<16x32xf32> to vector<16x32xbf16>
    %c0_1 = arith.constant 0 : index
    %c0_2 = arith.constant 0 : index
    %2 = vector.load %arg2[%c0_1, %c0_2] : memref<32x32xbf16, #tpu.memory_space<vmem>>, vector<32x32xbf16>
    %cst = arith.constant dense<0.000000e+00> : vector<16x32xf32>
    %3 = tpu.matmul %1, %2, %cst {dimension_numbers = #tpu.dot_dimension_numbers<[1], [0], [0], [1], [0, 0, 1, 1], [], []>} : vector<16x32xbf16>, vector<32x32xbf16>, vector<16x32xf32> -> vector<16x32xf32>
    %c0_3 = arith.constant 0 : index
    %c0_4 = arith.constant 0 : index
    %4 = vector.load %arg3[%c0_3, %c0_4] : memref<1x32xf32, #tpu.memory_space<vmem>>, vector<1x32xf32>
    %5 = vector.broadcast %4 : vector<1x32xf32> to vector<16x32xf32>
    %6 = arith.addf %3, %5 : vector<16x32xf32>
    %cst_5 = arith.constant 0.000000e+00 : f32
    %7 = vector.broadcast %cst_5 : f32 to vector<16x32xf32>
    %8 = arith.maximumf %6, %7 : vector<16x32xf32>
    %9 = arith.truncf %8 : vector<16x32xf32> to vector<16x32xbf16>
    %c0_6 = arith.constant 0 : index
    %c0_7 = arith.constant 0 : index
    %10 = vector.load %arg4[%c0_6, %c0_7] : memref<32x32xbf16, #tpu.memory_space<vmem>>, vector<32x32xbf16>
    %cst_8 = arith.constant dense<0.000000e+00> : vector<16x32xf32>
    %11 = tpu.matmul %9, %10, %cst_8 {dimension_numbers = #tpu.dot_dimension_numbers<[1], [0], [0], [1], [0, 0, 1, 1], [], []>} : vector<16x32xbf16>, vector<32x32xbf16>, vector<16x32xf32> -> vector<16x32xf32>
    %c0_9 = arith.constant 0 : index
    %c0_10 = arith.constant 0 : index
    %12 = vector.load %arg5[%c0_9, %c0_10] : memref<1x32xf32, #tpu.memory_space<vmem>>, vector<1x32xf32>
    %13 = vector.broadcast %12 : vector<1x32xf32> to vector<16x32xf32>
    %14 = arith.addf %11, %13 : vector<16x32xf32>
    %cst_11 = arith.constant 0.000000e+00 : f32
    %15 = vector.broadcast %cst_11 : f32 to vector<16x32xf32>
    %16 = arith.maximumf %14, %15 : vector<16x32xf32>
    %c0_12 = arith.constant 0 : index
    %c0_13 = arith.constant 0 : index
    %17 = vector.load %arg6[%c0_12, %c0_13] : memref<32x20xf32, #tpu.memory_space<vmem>>, vector<32x20xf32>
    %cst_14 = arith.constant dense<0.000000e+00> : vector<16x20xf32>
    %18 = tpu.matmul %16, %17, %cst_14 {dimension_numbers = #tpu.dot_dimension_numbers<[1], [0], [0], [1], [0, 0, 1, 1], [], []>} : vector<16x32xf32>, vector<32x20xf32>, vector<16x20xf32> -> vector<16x20xf32>
    %c0_15 = arith.constant 0 : index
    %c0_16 = arith.constant 0 : index
    %19 = vector.load %arg7[%c0_15, %c0_16] : memref<1x20xf32, #tpu.memory_space<vmem>>, vector<1x20xf32>
    %20 = vector.broadcast %19 : vector<1x20xf32> to vector<16x20xf32>
    %21 = arith.addf %18, %20 : vector<16x20xf32>
    %22 = vector.extract_strided_slice %21 {offsets = [0, 0], sizes = [16, 8], strides = [1, 1]} : vector<16x20xf32> to vector<16x8xf32>
    %23 = vector.extract_strided_slice %21 {offsets = [0, 8], sizes = [16, 8], strides = [1, 1]} : vector<16x20xf32> to vector<16x8xf32>
    %24 = math.exp %23 : vector<16x8xf32>
    %25 = vector.extract_strided_slice %21 {offsets = [0, 16], sizes = [16, 4], strides = [1, 1]} : vector<16x20xf32> to vector<16x4xf32>
    %cst_17 = arith.constant dense<0xFF800000> : vector<16xf32>
    %26 = vector.multi_reduction <maximumf>, %25, %cst_17 [1] : vector<16x4xf32> to vector<16xf32>
    %27 = vector.shape_cast %26 : vector<16xf32> to vector<16x1xf32>
    %28 = vector.broadcast %27 : vector<16x1xf32> to vector<16x4xf32>
    %29 = arith.subf %25, %28 : vector<16x4xf32>
    %30 = math.exp %29 : vector<16x4xf32>
    %cst_18 = arith.constant dense<0.000000e+00> : vector<16xf32>
    %31 = vector.multi_reduction <add>, %30, %cst_18 [1] : vector<16x4xf32> to vector<16xf32>
    %32 = vector.shape_cast %31 : vector<16xf32> to vector<16x1xf32>
    %33 = vector.broadcast %32 : vector<16x1xf32> to vector<16x4xf32>
    %34 = arith.divf %30, %33 : vector<16x4xf32>
    %35 = tpu.iota {dimensions = array<i32: 1>} : vector<16x4xi32>
    %cst_19 = arith.constant dense<0xFF800000> : vector<16xf32>
    %36 = vector.multi_reduction <maximumf>, %34, %cst_19 [1] : vector<16x4xf32> to vector<16xf32>
    %37 = vector.shape_cast %36 : vector<16xf32> to vector<16x1xf32>
    %38 = vector.broadcast %37 : vector<16x1xf32> to vector<16x4xf32>
    %39 = arith.cmpf oge, %34, %38 : vector<16x4xf32>
    %c4_i32 = arith.constant 4 : i32
    %40 = vector.broadcast %c4_i32 : i32 to vector<16x4xi32>
    %41 = arith.select %39, %35, %40 : vector<16x4xi1>, vector<16x4xi32>
    %cst_20 = arith.constant dense<2147483647> : vector<16xi32>
    %42 = vector.multi_reduction <minsi>, %41, %cst_20 [1] : vector<16x4xi32> to vector<16xi32>
    %43 = vector.shape_cast %42 : vector<16xi32> to vector<16x1xi32>
    %44 = vector.broadcast %43 : vector<16x1xi32> to vector<16x4xi32>
    %45 = arith.cmpi eq, %35, %44 : vector<16x4xi32>
    %46 = arith.extui %45 : vector<16x4xi1> to vector<16x4xi32>
    %47 = arith.sitofp %46 : vector<16x4xi32> to vector<16x4xf32>
    %cst_21 = arith.constant 0.000000e+00 : f32
    %48 = vector.broadcast %cst_21 : f32 to vector<16x2xf32>
    %49 = vector.extract_strided_slice %47 {offsets = [0, 0], sizes = [16, 1], strides = [1, 1]} : vector<16x4xf32> to vector<16x1xf32>
    %50 = vector.extract_strided_slice %22 {offsets = [0, 0], sizes = [16, 2], strides = [1, 1]} : vector<16x8xf32> to vector<16x2xf32>
    %51 = vector.broadcast %49 : vector<16x1xf32> to vector<16x2xf32>
    %52 = arith.mulf %51, %50 : vector<16x2xf32>
    %53 = arith.addf %48, %52 : vector<16x2xf32>
    %54 = vector.extract_strided_slice %47 {offsets = [0, 1], sizes = [16, 1], strides = [1, 1]} : vector<16x4xf32> to vector<16x1xf32>
    %55 = vector.extract_strided_slice %22 {offsets = [0, 2], sizes = [16, 2], strides = [1, 1]} : vector<16x8xf32> to vector<16x2xf32>
    %56 = vector.broadcast %54 : vector<16x1xf32> to vector<16x2xf32>
    %57 = arith.mulf %56, %55 : vector<16x2xf32>
    %58 = arith.addf %53, %57 : vector<16x2xf32>
    %59 = vector.extract_strided_slice %47 {offsets = [0, 2], sizes = [16, 1], strides = [1, 1]} : vector<16x4xf32> to vector<16x1xf32>
    %60 = vector.extract_strided_slice %22 {offsets = [0, 4], sizes = [16, 2], strides = [1, 1]} : vector<16x8xf32> to vector<16x2xf32>
    %61 = vector.broadcast %59 : vector<16x1xf32> to vector<16x2xf32>
    %62 = arith.mulf %61, %60 : vector<16x2xf32>
    %63 = arith.addf %58, %62 : vector<16x2xf32>
    %64 = vector.extract_strided_slice %47 {offsets = [0, 3], sizes = [16, 1], strides = [1, 1]} : vector<16x4xf32> to vector<16x1xf32>
    %65 = vector.extract_strided_slice %22 {offsets = [0, 6], sizes = [16, 2], strides = [1, 1]} : vector<16x8xf32> to vector<16x2xf32>
    %66 = vector.broadcast %64 : vector<16x1xf32> to vector<16x2xf32>
    %67 = arith.mulf %66, %65 : vector<16x2xf32>
    %68 = arith.addf %63, %67 : vector<16x2xf32>
    %69 = arith.truncf %68 : vector<16x2xf32> to vector<16x2xbf16>
    %c0_22 = arith.constant 0 : index
    %c0_23 = arith.constant 0 : index
    %70 = vector.load %arg8[%c0_22, %c0_23] : memref<16x2xbf16, #tpu.memory_space<vmem>>, vector<16x2xbf16>
    tpu.vector_store %arg8[%c0_22, %c0_23], %69 {strides = array<i32>} : memref<16x2xbf16, #tpu.memory_space<vmem>>, vector<16x2xbf16>,
    %71 = arith.truncf %22 : vector<16x8xf32> to vector<16x8xbf16>
    %c0_24 = arith.constant 0 : index
    %c0_25 = arith.constant 0 : index
    %72 = vector.load %arg9[%c0_24, %c0_25] : memref<16x8xbf16, #tpu.memory_space<vmem>>, vector<16x8xbf16>
    tpu.vector_store %arg9[%c0_24, %c0_25], %71 {strides = array<i32>} : memref<16x8xbf16, #tpu.memory_space<vmem>>, vector<16x8xbf16>,
    %73 = arith.truncf %24 : vector<16x8xf32> to vector<16x8xbf16>
    %c0_26 = arith.constant 0 : index
    %c0_27 = arith.constant 0 : index
    %74 = vector.load %arg10[%c0_26, %c0_27] : memref<16x8xbf16, #tpu.memory_space<vmem>>, vector<16x8xbf16>
    tpu.vector_store %arg10[%c0_26, %c0_27], %73 {strides = array<i32>} : memref<16x8xbf16, #tpu.memory_space<vmem>>, vector<16x8xbf16>,
    %c0_28 = arith.constant 0 : index
    %c0_29 = arith.constant 0 : index
    %75 = vector.load %arg11[%c0_28, %c0_29] : memref<16x4xf32, #tpu.memory_space<vmem>>, vector<16x4xf32>
    tpu.vector_store %arg11[%c0_28, %c0_29], %34 {strides = array<i32>} : memref<16x4xf32, #tpu.memory_space<vmem>>, vector<16x4xf32>,
    return
  }
  func.func @transform_0(%arg0: i32) -> (i32, i32) {
    %c0_i32 = arith.constant 0 : i32
    %c0_i32_0 = arith.constant 0 : i32
    return %arg0, %c0_i32 : i32, i32
  }
  func.func @transform_1(%arg0: i32) -> (i32, i32) {
    %c0_i32 = arith.constant 0 : i32
    %c0_i32_0 = arith.constant 0 : i32
    %c0_i32_1 = arith.constant 0 : i32
    return %c0_i32, %c0_i32_0 : i32, i32
  }
  func.func @transform_2(%arg0: i32) -> (i32, i32) {
    %c0_i32 = arith.constant 0 : i32
    %c0_i32_0 = arith.constant 0 : i32
    %c0_i32_1 = arith.constant 0 : i32
    return %c0_i32, %c0_i32_0 : i32, i32
  }
  func.func @transform_3(%arg0: i32) -> (i32, i32) {
    %c0_i32 = arith.constant 0 : i32
    %c0_i32_0 = arith.constant 0 : i32
    %c0_i32_1 = arith.constant 0 : i32
    return %c0_i32, %c0_i32_0 : i32, i32
  }
  func.func @transform_4(%arg0: i32) -> (i32, i32) {
    %c0_i32 = arith.constant 0 : i32
    %c0_i32_0 = arith.constant 0 : i32
    %c0_i32_1 = arith.constant 0 : i32
    return %c0_i32, %c0_i32_0 : i32, i32
  }
  func.func @transform_5(%arg0: i32) -> (i32, i32) {
    %c0_i32 = arith.constant 0 : i32
    %c0_i32_0 = arith.constant 0 : i32
    %c0_i32_1 = arith.constant 0 : i32
    return %c0_i32, %c0_i32_0 : i32, i32
  }
  func.func @transform_6(%arg0: i32) -> (i32, i32) {
    %c0_i32 = arith.constant 0 : i32
    %c0_i32_0 = arith.constant 0 : i32
    %c0_i32_1 = arith.constant 0 : i32
    return %c0_i32, %c0_i32_0 : i32, i32
  }
  func.func @transform_7(%arg0: i32) -> (i32, i32) {
    %c0_i32 = arith.constant 0 : i32
    %c0_i32_0 = arith.constant 0 : i32
    return %arg0, %c0_i32 : i32, i32
  }
  func.func @transform_8(%arg0: i32) -> (i32, i32) {
    %c0_i32 = arith.constant 0 : i32
    %c0_i32_0 = arith.constant 0 : i32
    return %arg0, %c0_i32 : i32, i32
  }
  func.func @transform_9(%arg0: i32) -> (i32, i32) {
    %c0_i32 = arith.constant 0 : i32
    %c0_i32_0 = arith.constant 0 : i32
    return %arg0, %c0_i32 : i32, i32
  }
  func.func @transform_10(%arg0: i32) -> (i32, i32) {
    %c0_i32 = arith.constant 0 : i32
    %c0_i32_0 = arith.constant 0 : i32
    return %arg0, %c0_i32 : i32, i32
  }
}

</mosaic_0001>

<llo_original>
// kernel: tpu_custom_call.1
$region0: #{tpu_custom_call.1}
  #allocation0 [shape = 'u32[]', space=smem, size = 0x4, offset = 0x4, fixed_abs, tag = 'smem constant byte address 0x4 - core index']
  #allocation1 [shape = 'u32[144,128]{1,0:T(1,128)}', space=vmem, size = 0x12000, scoped, tag = 'internal scratch']
  %s0 = inlined_call_operand.vmem [shape: f32[16,32], index: 0, kind: input, shape index: {}]
  %s1 = inlined_call_operand.vmem [shape: bf16[32,32], index: 1, kind: input, shape index: {}]
  %s2 = inlined_call_operand.vmem [shape: f32[1,32], index: 2, kind: input, shape index: {}]
  %s3 = inlined_call_operand.vmem [shape: bf16[32,32], index: 3, kind: input, shape index: {}]
  %s4 = inlined_call_operand.vmem [shape: f32[1,32], index: 4, kind: input, shape index: {}]
  %s5 = inlined_call_operand.vmem [shape: f32[32,20], index: 5, kind: input, shape index: {}]
  %s6 = inlined_call_operand.vmem [shape: f32[1,20], index: 6, kind: input, shape index: {}]
  %s7 = inlined_call_operand.vmem [shape: bf16[16,2], index: 7, kind: output, shape index: {0}]
  %s8 = inlined_call_operand.vmem [shape: bf16[16,8], index: 8, kind: output, shape index: {1}]
  %s9 = inlined_call_operand.vmem [shape: bf16[16,8], index: 9, kind: output, shape index: {2}]
  %s10 = inlined_call_operand.vmem [shape: f32[16,4], index: 10, kind: output, shape index: {3}]
  %11 = xla_tuple %s7, %s8, %s9, %s10
  %s12 = sld [smem:[#allocation0]]
  $region62: #{tpu_custom_call.1} parent=0
    _
  %s14 = ssub.s32 1, %s12
  %s15 = scalar_select 0, %s14, %s12
  // Predicated region
  $region2: #{tpu_custom_call.1} parent=0 // pred_check
    _
  $region3: #{tpu_custom_call.1} parent=0 // pred_check_branch
    %17 = sbr.rel (0) target = $region5
  $region4: #{tpu_custom_call.1} parent=0 // pred_region
    _
  $region5: #{tpu_custom_call.1} parent=0 // pred_fallthru
    _
  // Predicated region
  $region6: #{tpu_custom_call.1} parent=0 // pred_check
    _
  $region7: #{tpu_custom_call.1} parent=0 // pred_check_branch
    %19 = sbr.rel (0) target = $region9
  $region8: #{tpu_custom_call.1} parent=0 // pred_region
    _
  $region9: #{tpu_custom_call.1} parent=0 // pred_fallthru
    _
  // Predicated region
  $region10: #{tpu_custom_call.1} parent=0 // pred_check
    _
  $region11: #{tpu_custom_call.1} parent=0 // pred_check_branch
    %21 = sbr.rel (0) target = $region13
  $region12: #{tpu_custom_call.1} parent=0 // pred_region
    _
  $region13: #{tpu_custom_call.1} parent=0 // pred_fallthru
    _
  // Predicated region
  $region14: #{tpu_custom_call.1} parent=0 // pred_check
    _
  $region15: #{tpu_custom_call.1} parent=0 // pred_check_branch
    %23 = sbr.rel (0) target = $region17
  $region16: #{tpu_custom_call.1} parent=0 // pred_region
    _
  $region17: #{tpu_custom_call.1} parent=0 // pred_fallthru
    _
  // Predicated region
  $region18: #{tpu_custom_call.1} parent=0 // pred_check
    _
  $region19: #{tpu_custom_call.1} parent=0 // pred_check_branch
    %25 = sbr.rel (0) target = $region21
  $region20: #{tpu_custom_call.1} parent=0 // pred_region
    _
  $region21: #{tpu_custom_call.1} parent=0 // pred_fallthru
    _
  // Predicated region
  $region22: #{tpu_custom_call.1} parent=0 // pred_check
    _
  $region23: #{tpu_custom_call.1} parent=0 // pred_check_branch
    %27 = sbr.rel (0) target = $region25
  $region24: #{tpu_custom_call.1} parent=0 // pred_region
    _
  $region25: #{tpu_custom_call.1} parent=0 // pred_fallthru
    _
  // Predicated region
  $region26: #{tpu_custom_call.1} parent=0 // pred_check
    _
  $region27: #{tpu_custom_call.1} parent=0 // pred_check_branch
    %29 = sbr.rel (0) target = $region29
  $region28: #{tpu_custom_call.1} parent=0 // pred_region
    _
  $region29: #{tpu_custom_call.1} parent=0 // pred_fallthru
    _
  %v31 = vld [vmem:[%s0] sm:$0xff]
  %v32 = vld [vmem:[%s0 + $0x8] sm:$0xff]
  %v33 = vpack.c.bf16 %v32, %v31
  %v34 = vld [vmem:[%s1] sm:$0xf]
  %v35 = vld [vmem:[%s1 + $0x4] sm:$0xf]
  %v36 = vld [vmem:[%s1 + $0x8] sm:$0xf]
  %v37 = vld [vmem:[%s1 + $0xc] sm:$0xf]
  %v38 = vld [vmem:[%s2] sm:$0x1]
  %v40 = vlaneseq
  %v41 = vshrl.u32 %v40, 7
  %v42 = vsub.s32 0, %v41
  %v43 = vrot.slane %v38, %v42
  %v49 = vunpack.c.l.b16 %v34
  %v50 = vunpack.c.l.b16 %v35
  %v51 = vunpack.c.l.b16 %v36
  %v52 = vunpack.c.l.b16 %v37
  %v53 = vpack.c.b16 %v50, %v49
  %v54 = vpack.c.b16 %v52, %v51
  %vm57 = vcmask 261120
  %v59 = vsel %vm57, %v33, 0
  %61 = vmatprep.subr.bf16.mxu0 0
  %62 = vmatpush1.bf16.msra.mxu0 0
  %63 = vmatprep.subr.bf16.mxu0 0
  %64 = vmatpush1.bf16.msra.mxu0 0
  %65 = vmatprep.subr.bf16.mxu0 0
  %66 = vmatpush1.bf16.msra.mxu0 0
  %67 = vmatprep.subr.bf16.mxu0 0
  %68 = vmatpush1.bf16.msra.mxu0 0
  %69 = vmatprep.subr.bf16.mxu0 0
  %70 = vmatpush1.bf16.msra.mxu0 0
  %71 = vmatprep.subr.bf16.mxu0 0
  %72 = vmatpush1.bf16.msra.mxu0 0
  %73 = vmatprep.subr.bf16.mxu0 0
  %74 = vmatpush1.bf16.msra.mxu0 %v54
  %75 = vmatprep.subr.bf16.mxu0 0
  %76 = vmatpush1.bf16.msra.mxu0 %v53
  %77 = vmatprep.subr.bf16.mxu0 0
  %78 = vmatpush2.bf16.msra.mxu0 0
  %79 = vmatprep.subr.bf16.mxu0 0
  %80 = vmatpush2.bf16.msra.mxu0 0
  %81 = vmatprep.subr.bf16.mxu0 0
  %82 = vmatpush2.bf16.msra.mxu0 0
  %83 = vmatprep.subr.bf16.mxu0 0
  %84 = vmatpush2.bf16.msra.mxu0 0
  %85 = vmatprep.subr.bf16.mxu0 0
  %86 = vmatpush2.bf16.msra.mxu0 0
  %87 = vmatprep.subr.bf16.mxu0 0
  %88 = vmatpush2.bf16.msra.mxu0 0
  %89 = vmatprep.subr.bf16.mxu0 0
  %90 = vmatpush2.bf16.msra.mxu0 0
  %91 = vmatprep.subr.bf16.mxu0 0
  %92 = vmatpush2.bf16.msra.mxu0 0
  %93 = vmatprep.mubr.bf16.mxu0 0
  %94 = vmatmul.mubr.bf16.gmra.mxu0 %v59
  %v95 = vpop.f32.mrf.mxu0
  %v96 = vadd.f32 %v43, %v95
  %v97 = vpop.f32.mrf.mxu0
  %v98 = vpop.f32.mrf.mxu0
  %v99 = vadd.f32 %v43, %v98
  %v100 = vpop.f32.mrf.mxu0
  %101 = vdwg.mxu0
  %v102 = vmax.f32 %v96, 0.0
  %v103 = vmax.f32 %v99, 0.0
  %v104 = vpack.c.bf16 %v103, %v102
  %v105 = vld [vmem:[%s3] sm:$0xf]
  %v106 = vld [vmem:[%s3 + $0x4] sm:$0xf]
  %v107 = vld [vmem:[%s3 + $0x8] sm:$0xf]
  %v108 = vld [vmem:[%s3 + $0xc] sm:$0xf]
  %v109 = vld [vmem:[%s4] sm:$0x1]
  %v111 = vlaneseq
  %v112 = vshrl.u32 %v111, 7
  %v113 = vsub.s32 0, %v112
  %v114 = vrot.slane %v109, %v113
  %v120 = vunpack.c.l.b16 %v105
  %v121 = vunpack.c.l.b16 %v106
  %v122 = vunpack.c.l.b16 %v107
  %v123 = vunpack.c.l.b16 %v108
  %v124 = vpack.c.b16 %v121, %v120
  %v125 = vpack.c.b16 %v123, %v122
  %v129 = vsel %vm57, %v104, 0
  %131 = vmatprep.subr.bf16.mxu0 0
  %132 = vmatpush1.bf16.msra.mxu0 0
  %133 = vmatprep.subr.bf16.mxu0 0
  %134 = vmatpush1.bf16.msra.mxu0 0
  %135 = vmatprep.subr.bf16.mxu0 0
  %136 = vmatpush1.bf16.msra.mxu0 0
  %137 = vmatprep.subr.bf16.mxu0 0
  %138 = vmatpush1.bf16.msra.mxu0 0
  %139 = vmatprep.subr.bf16.mxu0 0
  %140 = vmatpush1.bf16.msra.mxu0 0
  %141 = vmatprep.subr.bf16.mxu0 0
  %142 = vmatpush1.bf16.msra.mxu0 0
  %143 = vmatprep.subr.bf16.mxu0 0
  %144 = vmatpush1.bf16.msra.mxu0 %v125
  %145 = vmatprep.subr.bf16.mxu0 0
  %146 = vmatpush1.bf16.msra.mxu0 %v124
  %147 = vmatprep.subr.bf16.mxu0 0
  %148 = vmatpush2.bf16.msra.mxu0 0
  %149 = vmatprep.subr.bf16.mxu0 0
  %150 = vmatpush2.bf16.msra.mxu0 0
  %151 = vmatprep.subr.bf16.mxu0 0
  %152 = vmatpush2.bf16.msra.mxu0 0
  %153 = vmatprep.subr.bf16.mxu0 0
  %154 = vmatpush2.bf16.msra.mxu0 0
  %155 = vmatprep.subr.bf16.mxu0 0
  %156 = vmatpush2.bf16.msra.mxu0 0
  %157 = vmatprep.subr.bf16.mxu0 0
  %158 = vmatpush2.bf16.msra.mxu0 0
  %159 = vmatprep.subr.bf16.mxu0 0
  %160 = vmatpush2.bf16.msra.mxu0 0
  %161 = vmatprep.subr.bf16.mxu0 0
  %162 = vmatpush2.bf16.msra.mxu0 0
  %163 = vmatprep.mubr.bf16.mxu0 0
  %164 = vmatmul.mubr.bf16.gmra.mxu0 %v129
  %v165 = vpop.f32.mrf.mxu0
  %v166 = vadd.f32 %v114, %v165
  %v167 = vpop.f32.mrf.mxu0
  %v168 = vpop.f32.mrf.mxu0
  %v169 = vadd.f32 %v114, %v168
  %v170 = vpop.f32.mrf.mxu0
  %171 = vdwg.mxu0
  %v172 = vmax.f32 %v166, 0.0
  %v173 = vmax.f32 %v169, 0.0
  %v174 = vld [vmem:[%s5] sm:$0xff]
  %v175 = vld [vmem:[%s5 + $0x8] sm:$0xff]
  %v176 = vld [vmem:[%s5 + $0x10] sm:$0xff]
  %v177 = vld [vmem:[%s5 + $0x18] sm:$0xff]
  %v178 = vld [vmem:[%s6] sm:$0x1]
  %v180 = vlaneseq
  %v181 = vshrl.u32 %v180, 7
  %v182 = vsub.s32 0, %v181
  %v183 = vrot.slane %v178, %v182
  %v186 = vsel %vm57, %v172, 0
  %v189 = vsel %vm57, %v173, 0
  %191 = vmatprep.subr.mxu0 0.0
  %192 = vmatpush1.msra.mxu0 0.0
  %193 = vmatprep.subr.mxu0 0.0
  %194 = vmatpush1.msra.mxu0 0.0
  %195 = vmatprep.subr.mxu0 0.0
  %196 = vmatpush1.msra.mxu0 0.0
  %197 = vmatprep.subr.mxu0 0.0
  %198 = vmatpush1.msra.mxu0 0.0
  %199 = vmatprep.subr.mxu0 0.0
  %200 = vmatpush1.msra.mxu0 0.0
  %201 = vmatprep.subr.mxu0 0.0
  %202 = vmatpush1.msra.mxu0 0.0
  %203 = vmatprep.subr.mxu0 0.0
  %204 = vmatpush1.msra.mxu0 0.0
  %205 = vmatprep.subr.mxu0 0.0
  %206 = vmatpush1.msra.mxu0 0.0
  %207 = vmatprep.subr.mxu0 0.0
  %208 = vmatpush1.msra.mxu0 0.0
  %209 = vmatprep.subr.mxu0 0.0
  %210 = vmatpush1.msra.mxu0 0.0
  %211 = vmatprep.subr.mxu0 0.0
  %212 = vmatpush1.msra.mxu0 0.0
  %213 = vmatprep.subr.mxu0 0.0
  %214 = vmatpush1.msra.mxu0 0.0
  %215 = vmatprep.subr.mxu0 0.0
  %216 = vmatpush1.msra.mxu0 %v177
  %217 = vmatprep.subr.mxu0 0.0
  %218 = vmatpush1.msra.mxu0 %v176
  %219 = vmatprep.subr.mxu0 0.0
  %220 = vmatpush1.msra.mxu0 %v175
  %221 = vmatprep.subr.mxu0 0.0
  %222 = vmatpush1.msra.mxu0 %v174
  %223 = vmatprep.subr.mxu0 0.0
  %224 = vmatpush2.msra.mxu0 0.0
  %225 = vmatprep.subr.mxu0 0.0
  %226 = vmatpush2.msra.mxu0 0.0
  %227 = vmatprep.subr.mxu0 0.0
  %228 = vmatpush2.msra.mxu0 0.0
  %229 = vmatprep.subr.mxu0 0.0
  %230 = vmatpush2.msra.mxu0 0.0
  %231 = vmatprep.subr.mxu0 0.0
  %232 = vmatpush2.msra.mxu0 0.0
  %233 = vmatprep.subr.mxu0 0.0
  %234 = vmatpush2.msra.mxu0 0.0
  %235 = vmatprep.subr.mxu0 0.0
  %236 = vmatpush2.msra.mxu0 0.0
  %237 = vmatprep.subr.mxu0 0.0
  %238 = vmatpush2.msra.mxu0 0.0
  %239 = vmatprep.subr.mxu0 0.0
  %240 = vmatpush2.msra.mxu0 0.0
  %241 = vmatprep.subr.mxu0 0.0
  %242 = vmatpush2.msra.mxu0 0.0
  %243 = vmatprep.subr.mxu0 0.0
  %244 = vmatpush2.msra.mxu0 0.0
  %245 = vmatprep.subr.mxu0 0.0
  %246 = vmatpush2.msra.mxu0 0.0
  %247 = vmatprep.subr.mxu0 0.0
  %248 = vmatpush2.msra.mxu0 0.0
  %249 = vmatprep.subr.mxu0 0.0
  %250 = vmatpush2.msra.mxu0 0.0
  %251 = vmatprep.subr.mxu0 0.0
  %252 = vmatpush2.msra.mxu0 0.0
  %253 = vmatprep.subr.mxu0 0.0
  %254 = vmatpush2.msra.mxu0 0.0
  %255 = vmatprep.mubr.f32.mxu0 0.0
  %256 = vmatmul.mubr.f32.gmra.mxu0 %v186
  %v257 = vpop.f32.mrf.mxu0
  %v258 = vadd.f32 %v183, %v257
  %v259 = vpop.f32.mrf.mxu0
  %260 = vmatprep.mubr.f32.mxu0 0.0
  %261 = vmatmul.mubr.f32.gmra.mxu0 %v189
  %v262 = vpop.f32.mrf.mxu0
  %v263 = vadd.f32 %v183, %v262
  %v264 = vpop.f32.mrf.mxu0
  %265 = vdwg.mxu0
  %v266 = vmul.f32 %v258, 1.442695
  %v267 = vpow.pop %v266
  %v268 = vmul.f32 %v263, 1.442695
  %v269 = vpow.pop %v268
  %vm270 = vcmask 162944
  %v271 = vsel %vm270, %v258, -inf
  %272 = vmax.xlane.f32.xlu0 %v271
  %v273 = vpop.xlane.xlu0 %272
  %v274 = vsel %vm270, %v263, -inf
  %275 = vmax.xlane.f32.xlu0 %v274
  %v276 = vpop.xlane.xlu0 %275
  %v277 = vsub.f32 %v258, %v273
  %v278 = vsub.f32 %v263, %v276
  %v279 = vmul.f32 %v277, 1.442695
  %v280 = vpow.pop %v279
  %v281 = vmul.f32 %v278, 1.442695
  %v282 = vpow.pop %v281
  %285 = vrot.lane.b32.xlu0 %v280, 112
  %v286 = vpop.permute.xlu0 %285
  %287 = vrot.lane.b32.xlu0 %v282, 112
  %v288 = vpop.permute.xlu0 %287
  %vm291 = vcmask 31744
  %v292 = vsel %vm291, %v286, 0.0
  %293 = vadd.xlane.f32.xlu0 %v292
  %v294 = vpop.xlane.xlu0 %293
  %v295 = vsel %vm291, %v288, 0.0
  %296 = vadd.xlane.f32.xlu0 %v295
  %v297 = vpop.xlane.xlu0 %296
  %v298 = vrcp.pop %v294
  %v299 = vmul.f32 %v280, %v298
  %v300 = vrcp.pop %v297
  %v301 = vmul.f32 %v282, %v300
  %v302 = vlaneseq
  %v303 = vand.u32 %v302, 127
  %v304 = vsel %vm270, %v299, -inf
  %305 = vmax.xlane.f32.xlu0 %v304
  %v306 = vpop.xlane.xlu0 %305
  %v307 = vsel %vm270, %v301, -inf
  %308 = vmax.xlane.f32.xlu0 %v307
  %v309 = vpop.xlane.xlu0 %308
  %vm310 = vcmp.ge.f32.partialorder %v299, %v306
  %vm311 = vcmp.ge.f32.partialorder %v301, %v309
  %312 = vrot.lane.b32.xlu0 %v303, 16
  %v313 = vpop.permute.xlu0 %312
  %v314 = vsel %vm310, %v313, 4
  %v315 = vsel %vm311, %v313, 4
  %v316 = vsel %vm270, %v314, 2147483647
  %v317 = vand.u32 %v316, 65535
  %v318 = vshra.s32 %v316, 16
  %v319 = vcvt.s32.f32 %v317
  %v320 = vcvt.s32.f32 %v318
  %321 = vmin.xlane.f32.xlu0 %v320
  %v322 = vpop.xlane.xlu0 %321
  %vm323 = vcmp.eq.f32.partialorder %v320, %v322
  %v324 = vsel %vm323, %v319, inf
  %325 = vmin.xlane.f32.xlu0 %v324
  %v326 = vpop.xlane.xlu0 %325
  %v327 = vcvt.f32.s32 %v326
  %v328 = vcvt.f32.s32 %v322
  %v329 = vshll.u32 %v328, 16
  %v330 = vadd.s32 %v329, %v327
  %v331 = vsel %vm270, %v315, 2147483647
  %v332 = vand.u32 %v331, 65535
  %v333 = vshra.s32 %v331, 16
  %v334 = vcvt.s32.f32 %v332
  %v335 = vcvt.s32.f32 %v333
  %336 = vmin.xlane.f32.xlu0 %v335
  %v337 = vpop.xlane.xlu0 %336
  %vm338 = vcmp.eq.f32.partialorder %v335, %v337
  %v339 = vsel %vm338, %v334, inf
  %340 = vmin.xlane.f32.xlu0 %v339
  %v341 = vpop.xlane.xlu0 %340
  %v342 = vcvt.f32.s32 %v341
  %v343 = vcvt.f32.s32 %v337
  %v344 = vshll.u32 %v343, 16
  %v345 = vadd.s32 %v344, %v342
  %vm346 = vcmp.eq.s32.totalorder %v303, %v330
  %vm347 = vcmp.eq.s32.totalorder %v303, %v345
  %v348 = vsel %vm346, 1, 0
  %v349 = vsel %vm347, 1, 0
  %v350 = vcvt.s32.f32 %v348
  %v351 = vcvt.s32.f32 %v349
  %353 = vset.pattern.permute.xlu0 0
  %354 = vperm.xlu0 %353, %v350
  %v355 = vpop.permute.xlu0 %354
  %358 = vset.pattern.permute.xlu0 0
  %359 = vperm.xlu0 %358, %v351
  %v360 = vpop.permute.xlu0 %359
  %v362 = vmul.f32 %v355, %v258
  %v363 = vmul.f32 %v360, %v263
  %v364 = vadd.f32 %v362, 0.0
  %v365 = vadd.f32 %v363, 0.0
  %366 = vset.pattern.permute.xlu0 1
  %367 = vperm.xlu0 %366, %v350
  %v368 = vpop.permute.xlu0 %367
  %370 = vset.pattern.permute.xlu0 1
  %371 = vperm.xlu0 %370, %v351
  %v372 = vpop.permute.xlu0 %371
  %v374 = vmul.f32 %v368, %v258
  %v375 = vmul.f32 %v372, %v263
  %378 = vrot.lane.b32.xlu0 %v374, 126
  %v379 = vpop.permute.xlu0 %378
  %380 = vrot.lane.b32.xlu0 %v375, 126
  %v381 = vpop.permute.xlu0 %380
  %v384 = vadd.f32 %v364, %v379
  %v385 = vadd.f32 %v365, %v381
  %386 = vset.pattern.permute.xlu0 2
  %387 = vperm.xlu0 %386, %v350
  %v388 = vpop.permute.xlu0 %387
  %390 = vset.pattern.permute.xlu0 2
  %391 = vperm.xlu0 %390, %v351
  %v392 = vpop.permute.xlu0 %391
  %v394 = vmul.f32 %v388, %v258
  %v395 = vmul.f32 %v392, %v263
  %398 = vrot.lane.b32.xlu0 %v394, 124
  %v399 = vpop.permute.xlu0 %398
  %400 = vrot.lane.b32.xlu0 %v395, 124
  %v401 = vpop.permute.xlu0 %400
  %v404 = vadd.f32 %v384, %v399
  %v405 = vadd.f32 %v385, %v401
  %406 = vset.pattern.permute.xlu0 3
  %407 = vperm.xlu0 %406, %v350
  %v408 = vpop.permute.xlu0 %407
  %410 = vset.pattern.permute.xlu0 3
  %411 = vperm.xlu0 %410, %v351
  %v412 = vpop.permute.xlu0 %411
  %v414 = vmul.f32 %v408, %v258
  %v415 = vmul.f32 %v412, %v263
  %418 = vrot.lane.b32.xlu0 %v414, 122
  %v419 = vpop.permute.xlu0 %418
  %420 = vrot.lane.b32.xlu0 %v415, 122
  %v421 = vpop.permute.xlu0 %420
  %v424 = vadd.f32 %v404, %v419
  %v425 = vadd.f32 %v405, %v421
  %v426 = vpack.c.bf16 %v425, %v424
  %v428 = vunpack.c.l.b16 %v426
  %v429 = vunpack.c.h.b16 %v426
  %v430 = vpack.c.b16 %v428, %v428
  %v431 = vpack.c.b16 %v429, %v429
  %vm434 = vcmask 11264
  %435 = vst.msk [vmem:[%s7] sm:$0xf] %vm434, %v430
  %436 = vst.msk [vmem:[%s7 + $0x4] sm:$0xf] %vm434, %v431
  %v437 = vpack.c.bf16 %v263, %v258
  %v439 = vunpack.c.l.b16 %v437
  %v440 = vunpack.c.h.b16 %v437
  %v441 = vpack.c.b16 %v439, %v439
  %v442 = vpack.c.b16 %v440, %v440
  %vm445 = vcmask 60416
  %446 = vst.msk [vmem:[%s8] sm:$0xf] %vm445, %v441
  %447 = vst.msk [vmem:[%s8 + $0x4] sm:$0xf] %vm445, %v442
  %v448 = vpack.c.bf16 %v269, %v267
  %v450 = vunpack.c.l.b16 %v448
  %v451 = vunpack.c.h.b16 %v448
  %v452 = vpack.c.b16 %v450, %v450
  %v453 = vpack.c.b16 %v451, %v451
  %454 = vrot.lane.b32.xlu0 %v452, 120
  %v455 = vpop.permute.xlu0 %454
  %456 = vrot.lane.b32.xlu0 %v453, 120
  %v457 = vpop.permute.xlu0 %456
  %460 = vst.msk [vmem:[%s9] sm:$0xf] %vm445, %v455
  %461 = vst.msk [vmem:[%s9 + $0x4] sm:$0xf] %vm445, %v457
  %464 = vrot.lane.b32.xlu0 %v299, 112
  %v465 = vpop.permute.xlu0 %464
  %466 = vrot.lane.b32.xlu0 %v301, 112
  %v467 = vpop.permute.xlu0 %466
  %470 = vst.msk [vmem:[%s10] sm:$0xff] %vm291, %v465
  %471 = vst.msk [vmem:[%s10 + $0x8] sm:$0xff] %vm291, %v467
  // Predicated region
  $region30: #{tpu_custom_call.1} parent=0 // pred_check
    _
  $region31: #{tpu_custom_call.1} parent=0 // pred_check_branch
    %473 = sbr.rel (0) target = $region33
  $region32: #{tpu_custom_call.1} parent=0 // pred_region
    _
  $region33: #{tpu_custom_call.1} parent=0 // pred_fallthru
    _
  // Predicated region
  $region34: #{tpu_custom_call.1} parent=0 // pred_check
    _
  $region35: #{tpu_custom_call.1} parent=0 // pred_check_branch
    %475 = sbr.rel (0) target = $region37
  $region36: #{tpu_custom_call.1} parent=0 // pred_region
    _
  $region37: #{tpu_custom_call.1} parent=0 // pred_fallthru
    _
  // Predicated region
  $region38: #{tpu_custom_call.1} parent=0 // pred_check
    _
  $region39: #{tpu_custom_call.1} parent=0 // pred_check_branch
    %477 = sbr.rel (0) target = $region41
  $region40: #{tpu_custom_call.1} parent=0 // pred_region
    _
  $region41: #{tpu_custom_call.1} parent=0 // pred_fallthru
    _
  // Predicated region
  $region42: #{tpu_custom_call.1} parent=0 // pred_check
    _
  $region43: #{tpu_custom_call.1} parent=0 // pred_check_branch
    %479 = sbr.rel (0) target = $region45
  $region44: #{tpu_custom_call.1} parent=0 // pred_region
    _
  $region45: #{tpu_custom_call.1} parent=0 // pred_fallthru
    _
  // Predicated region
  $region46: #{tpu_custom_call.1} parent=0 // pred_check
    _
  $region47: #{tpu_custom_call.1} parent=0 // pred_check_branch
    %481 = sbr.rel (0) target = $region49
  $region48: #{tpu_custom_call.1} parent=0 // pred_region
    _
  $region49: #{tpu_custom_call.1} parent=0 // pred_fallthru
    _
  // Predicated region
  $region50: #{tpu_custom_call.1} parent=0 // pred_check
    _
  $region51: #{tpu_custom_call.1} parent=0 // pred_check_branch
    %483 = sbr.rel (0) target = $region53
  $region52: #{tpu_custom_call.1} parent=0 // pred_region
    _
  $region53: #{tpu_custom_call.1} parent=0 // pred_fallthru
    _
  // Predicated region
  $region54: #{tpu_custom_call.1} parent=0 // pred_check
    _
  $region55: #{tpu_custom_call.1} parent=0 // pred_check_branch
    %485 = sbr.rel (0) target = $region57
  $region56: #{tpu_custom_call.1} parent=0 // pred_region
    _
  $region57: #{tpu_custom_call.1} parent=0 // pred_fallthru
    _
  // Predicated region
  $region58: #{tpu_custom_call.1} parent=0 // pred_check
    _
  $region59: #{tpu_custom_call.1} parent=0 // pred_check_branch
    %487 = sbr.rel (0) target = $region61
  $region60: #{tpu_custom_call.1} parent=0 // pred_region
    _
  $region61: #{tpu_custom_call.1} parent=0 // pred_fallthru
    _

</llo_original>
